<compile_context>
chip_gen: v6e
topology: v6e:2x2x1
jax: 0.10.0
libtpu: 0.0.40
codegen_flags: <defaults>
</compile_context>

<pallas_src>
import functools

import jax
import jax.numpy as jnp
from jax.experimental import pallas as pl
from jax.experimental.pallas import tpu as pltpu

# ----------------------------- configuration --------------------------------
TOTAL_VOXELS = 300          # deliberately NOT a multiple of 8/128: tests padding
DIM_IN = 64
DIM_OUT = 128               # proj produces 2*DIM_OUT = 256 features


# ------------------------------- helpers -------------------------------------
def _round_up(n, m):
    return ((n + m - 1) // m) * m


def _choose_row_tile(t, block_rows, *, min_steps=2, sublanes=8):
    """Largest row tile <= block_rows (multiple of 8 sublanes) that still gives
    >= min_steps grid steps when the problem allows it (keeps both v7x
    TensorCores busy via dimension_semantics=('parallel',))."""
    tm = min(block_rows, _round_up(t, sublanes))
    while tm > sublanes and pl.cdiv(t, tm) < min_steps:
        tm = max(sublanes, _round_up(tm // 2, sublanes))
    return tm


# ------------------------------- kernel -------------------------------------
def geglu_kernel(x_ref, w_ref, b_ref, o_ref, *, dim_out):
    x = x_ref[...]                                                    # (TM, dim_in)

    # Single full-width MXU matmul, f32 accumulation; bias broadcast-add.
    y = jnp.dot(x, w_ref[...], preferred_element_type=jnp.float32) + b_ref[...]

    # chunk(2, dim=-1): with dim_out % 128 == 0 this is a free vreg selection
    # (no lane shuffle, no VMEM copy).
    h = y[:, :dim_out]
    g = y[:, dim_out:]

    # GELU (tanh approximation -> tanh runs on the EUP slot).  Epilogue kept in
    # f32 (post-accumulation) and trimmed: 0.5 folded into h, cubic factored.
    c = 0.7978845608028654            # sqrt(2/pi)
    g2 = g * g
    inner = (c * g) * (1.0 + 0.044715 * g2)
    o_ref[...] = ((0.5 * h) * (g * (1.0 + jnp.tanh(inner)))).astype(o_ref.dtype)


# ------------------------------- wrapper -------------------------------------
def geglu(x, w_proj, b_proj, *, dim_out, block_rows=2048, io_dtype=None):
    """x: [T, dim_in]; w_proj: [dim_in, 2*dim_out] (= nn.Linear.weight.T);
    b_proj: [2*dim_out].  io_dtype=jnp.bfloat16 enables narrow I/O."""
    t, dim_in = x.shape
    # NOTE: PyTorch nn.Linear.weight is [2*dim_out, dim_in]; pass weight.T here.
    assert w_proj.shape == (dim_in, 2 * dim_out), (
        "w_proj must be [dim_in, 2*dim_out]; transpose nn.Linear.weight")
    assert b_proj.shape == (2 * dim_out,)
    assert dim_out % 128 == 0, "dim_out must be lane-aligned for the free split"

    out_dtype = io_dtype if io_dtype is not None else x.dtype
    if io_dtype is not None:
        x = x.astype(io_dtype)
        w_proj = w_proj.astype(io_dtype)
        b_proj = b_proj.astype(io_dtype)

    # Row tile + host-side padding (cheaper than a masked last tile).
    tm = _choose_row_tile(t, block_rows)
    t_pad = _round_up(t, tm)
    if t_pad != t:
        x = jnp.pad(x, ((0, t_pad - t), (0, 0)))
    grid = (t_pad // tm,)

    b2 = b_proj.reshape(1, 2 * dim_out)

    itemsize = jnp.dtype(x.dtype).itemsize
    out_itemsize = jnp.dtype(out_dtype).itemsize
    cost = pl.CostEstimate(
        flops=2 * t_pad * dim_in * (2 * dim_out) + 10 * t_pad * dim_out,
        transcendentals=t_pad * dim_out,
        bytes_accessed=(t_pad * dim_in + dim_in * 2 * dim_out + 2 * dim_out) * itemsize
        + t_pad * dim_out * out_itemsize,
    )

    out = pl.pallas_call(
        functools.partial(geglu_kernel, dim_out=dim_out),
        out_shape=jax.ShapeDtypeStruct((t_pad, dim_out), out_dtype),
        grid=grid,
        in_specs=[
            pl.BlockSpec((tm, dim_in), lambda i: (i, 0)),            # x tile
            pl.BlockSpec((dim_in, 2 * dim_out), lambda i: (0, 0)),   # W (resident)
            pl.BlockSpec((1, 2 * dim_out), lambda i: (0, 0)),        # bias
        ],
        out_specs=pl.BlockSpec((tm, dim_out), lambda i: (i, 0)),
        compiler_params=pltpu.CompilerParams(
            dimension_semantics=("parallel",)),
        cost_estimate=cost,
    )(x, w_proj, b2)

    return out[:t] if t_pad != t else out


# --------------------------- pure-JAX reference -------------------------------
def geglu_ref(x, w_proj, b_proj, dim_out, approximate):
    y = x @ w_proj + b_proj
    h, g = y[:, :dim_out], y[:, dim_out:]
    return h * jax.nn.gelu(g, approximate=approximate)


# --------------------------------- main --------------------------------------
if __name__ == "__main__":
    key = jax.random.PRNGKey(0)
    k_x, k_w, k_b = jax.random.split(key, 3)

    # Flattened jagged voxel features (data.jdata) — odd T exercises padding.
    x = jax.random.normal(k_x, (TOTAL_VOXELS, DIM_IN), dtype=jnp.float32)

    # nn.Linear(dim_in, 2*dim_out) params in [in, out] layout (= weight.T) + bias.
    w_proj = jax.random.normal(k_w, (DIM_IN, 2 * DIM_OUT), dtype=jnp.float32) * 0.05
    b_proj = jax.random.normal(k_b, (2 * DIM_OUT,), dtype=jnp.float32) * 0.05

    # ---- f32 path ----
    out = geglu(x, w_proj, b_proj, dim_out=DIM_OUT)
    out = jax.block_until_ready(out)
    assert out.shape == (TOTAL_VOXELS, DIM_OUT)

    ref_tanh = geglu_ref(x, w_proj, b_proj, DIM_OUT, approximate=True)
    assert jnp.allclose(out, ref_tanh, atol=1e-4, rtol=1e-4), \
        "mismatch vs tanh-GELU reference"

    ref_exact = geglu_ref(x, w_proj, b_proj, DIM_OUT, approximate=False)
    assert jnp.allclose(out, ref_exact, atol=3e-3, rtol=3e-3), \
        "mismatch vs exact-GELU reference"

    # ---- bf16 I/O path (optional perf mode: half HBM traffic, 2x MXU rate) ----
    out_bf16 = geglu(x, w_proj, b_proj, dim_out=DIM_OUT, io_dtype=jnp.bfloat16)
    out_bf16 = jax.block_until_ready(out_bf16)
    assert out_bf16.shape == (TOTAL_VOXELS, DIM_OUT)
    assert out_bf16.dtype == jnp.bfloat16
    assert jnp.allclose(out_bf16.astype(jnp.float32), ref_tanh, atol=1e-1, rtol=1e-1), \
        "bf16 path diverged from reference"

    print("KERNEL_OK")
</pallas_src>

<mosaic_0001>
module attributes {stable_mosaic.version = 11 : i64} {
  func.func @geglu_kernel(%arg0: i32, %arg1: memref<152x64xf32, #tpu.memory_space<vmem>>, %arg2: memref<64x256xf32, #tpu.memory_space<vmem>>, %arg3: memref<1x256xf32, #tpu.memory_space<vmem>>, %arg4: memref<152x128xf32, #tpu.memory_space<vmem>>) attributes {dimension_semantics = [#tpu.dimension_semantics<parallel>], iteration_bounds = array<i64: 2>, scalar_prefetch = 0 : i64, scratch_operands = 0 : i64, tpu.core_type = #tpu.core_type<tc>, window_params = [{transform_indices = @transform_0, window_bounds = array<i64: 152, 64>}, {pipeline_mode = #tpu.pipeline_mode<synchronous>, transform_indices = @transform_1, window_bounds = array<i64: 64, 256>}, {pipeline_mode = #tpu.pipeline_mode<synchronous>, transform_indices = @transform_2, window_bounds = array<i64: 1, 256>}, {transform_indices = @transform_3, window_bounds = array<i64: 152, 128>}]} {
    %c0 = arith.constant 0 : index
    %c0_0 = arith.constant 0 : index
    %0 = vector.load %arg1[%c0, %c0_0] : memref<152x64xf32, #tpu.memory_space<vmem>>, vector<152x64xf32>
    %c0_1 = arith.constant 0 : index
    %c0_2 = arith.constant 0 : index
    %1 = vector.load %arg2[%c0_1, %c0_2] : memref<64x256xf32, #tpu.memory_space<vmem>>, vector<64x256xf32>
    %cst = arith.constant dense<0.000000e+00> : vector<152x256xf32>
    %2 = tpu.matmul %0, %1, %cst {dimension_numbers = #tpu.dot_dimension_numbers<[1], [0], [0], [1], [0, 0, 1, 1], [], []>} : vector<152x64xf32>, vector<64x256xf32>, vector<152x256xf32> -> vector<152x256xf32>
    %c0_3 = arith.constant 0 : index
    %c0_4 = arith.constant 0 : index
    %3 = vector.load %arg3[%c0_3, %c0_4] : memref<1x256xf32, #tpu.memory_space<vmem>>, vector<1x256xf32>
    %4 = vector.broadcast %3 : vector<1x256xf32> to vector<152x256xf32>
    %5 = arith.addf %2, %4 : vector<152x256xf32>
    %6 = vector.extract_strided_slice %5 {offsets = [0, 0], sizes = [152, 128], strides = [1, 1]} : vector<152x256xf32> to vector<152x128xf32>
    %7 = vector.extract_strided_slice %5 {offsets = [0, 128], sizes = [152, 128], strides = [1, 1]} : vector<152x256xf32> to vector<152x128xf32>
    %8 = arith.mulf %7, %7 : vector<152x128xf32>
    %cst_5 = arith.constant 0.797884583 : f32
    %9 = vector.broadcast %cst_5 : f32 to vector<152x128xf32>
    %10 = arith.mulf %9, %7 : vector<152x128xf32>
    %cst_6 = arith.constant 4.471500e-02 : f32
    %11 = vector.broadcast %cst_6 : f32 to vector<152x128xf32>
    %12 = arith.mulf %11, %8 : vector<152x128xf32>
    %cst_7 = arith.constant 1.000000e+00 : f32
    %13 = vector.broadcast %cst_7 : f32 to vector<152x128xf32>
    %14 = arith.addf %13, %12 : vector<152x128xf32>
    %15 = arith.mulf %10, %14 : vector<152x128xf32>
    %cst_8 = arith.constant 5.000000e-01 : f32
    %16 = vector.broadcast %cst_8 : f32 to vector<152x128xf32>
    %17 = arith.mulf %16, %6 : vector<152x128xf32>
    %18 = math.tanh %15 : vector<152x128xf32>
    %cst_9 = arith.constant 1.000000e+00 : f32
    %19 = vector.broadcast %cst_9 : f32 to vector<152x128xf32>
    %20 = arith.addf %19, %18 : vector<152x128xf32>
    %21 = arith.mulf %7, %20 : vector<152x128xf32>
    %22 = arith.mulf %17, %21 : vector<152x128xf32>
    %c0_10 = arith.constant 0 : index
    %c0_11 = arith.constant 0 : index
    %23 = vector.load %arg4[%c0_10, %c0_11] : memref<152x128xf32, #tpu.memory_space<vmem>>, vector<152x128xf32>
    tpu.vector_store %arg4[%c0_10, %c0_11], %22 {strides = array<i32>} : memref<152x128xf32, #tpu.memory_space<vmem>>, vector<152x128xf32>,
    return
  }
  func.func @transform_0(%arg0: i32) -> (i32, i32) {
    %c0_i32 = arith.constant 0 : i32
    %c0_i32_0 = arith.constant 0 : i32
    return %arg0, %c0_i32 : i32, i32
  }
  func.func @transform_1(%arg0: i32) -> (i32, i32) {
    %c0_i32 = arith.constant 0 : i32
    %c0_i32_0 = arith.constant 0 : i32
    %c0_i32_1 = arith.constant 0 : i32
    return %c0_i32, %c0_i32_0 : i32, i32
  }
  func.func @transform_2(%arg0: i32) -> (i32, i32) {
    %c0_i32 = arith.constant 0 : i32
    %c0_i32_0 = arith.constant 0 : i32
    %c0_i32_1 = arith.constant 0 : i32
    return %c0_i32, %c0_i32_0 : i32, i32
  }
  func.func @transform_3(%arg0: i32) -> (i32, i32) {
    %c0_i32 = arith.constant 0 : i32
    %c0_i32_0 = arith.constant 0 : i32
    return %arg0, %c0_i32 : i32, i32
  }
}

</mosaic_0001>

<llo_original>
// kernel: tpu_custom_call.1
$region0: #{tpu_custom_call.1}
  #allocation0 [shape = 'u32[]', space=smem, size = 0x4, offset = 0x4, fixed_abs, tag = 'smem constant byte address 0x4 - core index']
  #allocation1 [shape = 'u32[144,128]{1,0:T(1,128)}', space=vmem, size = 0x12000, scoped, tag = 'internal scratch']
  %s0 = inlined_call_operand.vmem [shape: f32[304,64], index: 0, kind: input, shape index: {}]
  %s1 = inlined_call_operand.vmem [shape: f32[64,256], index: 1, kind: input, shape index: {}]
  %s2 = inlined_call_operand.vmem [shape: f32[1,256], index: 2, kind: input, shape index: {}]
  %s3 = inlined_call_operand.hbm [shape: f32[304,128], index: 3, kind: output, shape index: {}]
  %s4 = sld [smem:[#allocation0]]
  $region45: #{tpu_custom_call.1} parent=0
    _
  %s6 = ssub.s32 1, %s4
  %s7 = scalar_select 0, %s6, %s4
  $region1: #{tpu_custom_call.1} parent=0
    #allocation2 [shape = 'u8[155648]{0}', space=vmem, size = 0x26000, scoped, tag = 'output window, operand 0']
    #allocation3 [shape = 's32[2]{0}', space=sflag, size = 0x8, scoped, tag = 'scoped memory for tpu_custom_call.1']
    %8 = vsyncpa [#allocation3], 0
    %s9 = scalar_lea.sflag [#allocation3], 1
    %10 = vsyncpa %s9, 0
    loop: start=0, step=1, limit=4
    $region2: #{tpu_custom_call.1} parent=1 // loop_pre_header
      _
    $region3: #{tpu_custom_call.1} parent=1 // loop_header
      %s12 = sphi 0, %s16
      %p13 = scmp.ge.s32.totalorder %s12, 4
      %s22 = sphi 0, %s24
      %s25 = sphi 0, %s22
      %s26 = sphi 0, %s25
      %s42 = sphi 0, %s26
      %s46 = sphi 0, %s46
      %s48 = sphi 0, %s46
      %s49 = sphi 0, %s48
      %s63 = sphi 0, %s49
      %s67 = sphi 0, %s67
      %s69 = sphi 0, %s67
      %s70 = sphi 0, %s69
      %s84 = sphi 0, %s70
      %s90 = sphi 0, %s92
      %s93 = sphi 0, %s90
      %s94 = sphi 0, %s93
      %s110 = sphi 0, %s94
    $region4: #{tpu_custom_call.1} parent=1 // loop_header_branch
      %15 = sbr.rel (%p13) target = $region8
    $region5: #{tpu_custom_call.1} parent=1 // loop_body
      %s17 = ssub.s32 %s12, 1
      %s18 = ssub.s32 %s12, 2
      %s19 = sadd.s32 %s12, 1
      %s20 = ssub.s32 %s12, %s19
      %p21 = scmp.eq.s32.totalorder %s20, 0
      %s23 = sadd.s32 %s22, 1
      %s24 = scalar_select %p21, %s22, %s23
      %p27 = pneg %p21
      %p28 = scmp.eq.s32.totalorder %s12, 1
      %p29 = por %p27, %p28
      %p30 = scmp.ne.s32.totalorder %s22, %s25
      %p31 = scmp.eq.s32.totalorder %s12, 0
      %p32 = por %p30, %p31
      %p33 = scmp.ne.s32.totalorder %s22, %s25
      %p34 = scmp.eq.s32.totalorder %s17, 1
      %p35 = por %p33, %p34
      %p36 = scmp.ne.s32.totalorder %s25, %s26
      %p37 = scmp.eq.s32.totalorder %s17, 0
      %p38 = por %p36, %p37
      %p39 = scmp.ne.s32.totalorder %s25, %s26
      %p40 = scmp.eq.s32.totalorder %s18, 1
      %p41 = por %p39, %p40
      %p43 = scmp.ne.s32.totalorder %s26, %s42
      %p44 = scmp.eq.s32.totalorder %s18, 0
      %p45 = por %p43, %p44
      %s47 = sadd.s32 %s46, 1
      %p50 = scmp.eq.s32.totalorder %s12, 1
      %p51 = scmp.ne.s32.totalorder %s46, %s48
      %p52 = scmp.eq.s32.totalorder %s12, 0
      %p53 = por %p51, %p52
      %p54 = scmp.ne.s32.totalorder %s46, %s48
      %p55 = scmp.eq.s32.totalorder %s17, 1
      %p56 = por %p54, %p55
      %p57 = scmp.ne.s32.totalorder %s48, %s49
      %p58 = scmp.eq.s32.totalorder %s17, 0
      %p59 = por %p57, %p58
      %p60 = scmp.ne.s32.totalorder %s48, %s49
      %p61 = scmp.eq.s32.totalorder %s18, 1
      %p62 = por %p60, %p61
      %p64 = scmp.ne.s32.totalorder %s49, %s63
      %p65 = scmp.eq.s32.totalorder %s18, 0
      %p66 = por %p64, %p65
      %s68 = sadd.s32 %s67, 1
      %p71 = scmp.eq.s32.totalorder %s12, 1
      %p72 = scmp.ne.s32.totalorder %s67, %s69
      %p73 = scmp.eq.s32.totalorder %s12, 0
      %p74 = por %p72, %p73
      %p75 = scmp.ne.s32.totalorder %s67, %s69
      %p76 = scmp.eq.s32.totalorder %s17, 1
      %p77 = por %p75, %p76
      %p78 = scmp.ne.s32.totalorder %s69, %s70
      %p79 = scmp.eq.s32.totalorder %s17, 0
      %p80 = por %p78, %p79
      %p81 = scmp.ne.s32.totalorder %s69, %s70
      %p82 = scmp.eq.s32.totalorder %s18, 1
      %p83 = por %p81, %p82
      %p85 = scmp.ne.s32.totalorder %s70, %s84
      %p86 = scmp.eq.s32.totalorder %s18, 0
      %p87 = por %p85, %p86
      %s88 = ssub.s32 %s12, %s19
      %p89 = scmp.eq.s32.totalorder %s88, 0
      %s91 = sadd.s32 %s90, 1
      %s92 = scalar_select %p89, %s90, %s91
      %p95 = pneg %p89
      %p96 = scmp.eq.s32.totalorder %s12, 1
      %p97 = por %p95, %p96
      %p98 = scmp.ne.s32.totalorder %s90, %s93
      %p99 = scmp.eq.s32.totalorder %s12, 0
      %p100 = por %p98, %p99
      %p101 = scmp.ne.s32.totalorder %s90, %s93
      %p102 = scmp.eq.s32.totalorder %s17, 1
      %p103 = por %p101, %p102
      %p104 = scmp.ne.s32.totalorder %s93, %s94
      %p105 = scmp.eq.s32.totalorder %s17, 0
      %p106 = por %p104, %p105
      %p107 = scmp.ne.s32.totalorder %s93, %s94
      %p108 = scmp.eq.s32.totalorder %s18, 1
      %p109 = por %p107, %p108
      %p111 = scmp.ne.s32.totalorder %s94, %s110
      %p112 = scmp.eq.s32.totalorder %s18, 0
      %p113 = por %p111, %p112
      %p114 = scmp.le.s32.totalorder 1, %s12
      %p115 = scmp.lt.s32.totalorder %s12, 3
      %p116 = pnand %p114, %p115
      %p117 = pneg %p116
      // Predicated region
      $region9: #{tpu_custom_call.1} parent=5 // pred_check
        _
      $region10: #{tpu_custom_call.1} parent=5 // pred_check_branch
        %119 = sbr.rel (%p116) target = $region12
      $region11: #{tpu_custom_call.1} parent=5 // pred_region
        %s120 = ssub.s32 %s12, 1
        // Predicated region
        $region13: #{tpu_custom_call.1} parent=11 // pred_check
          %p121 = pneg %p59
        $region14: #{tpu_custom_call.1} parent=11 // pred_check_branch
          %123 = sbr.rel (%p121) target = $region16
        $region15: #{tpu_custom_call.1} parent=11 // pred_region
          _
        $region16: #{tpu_custom_call.1} parent=11 // pred_fallthru
          _
        // Predicated region
        $region17: #{tpu_custom_call.1} parent=11 // pred_check
          %p124 = pneg %p80
        $region18: #{tpu_custom_call.1} parent=11 // pred_check_branch
          %126 = sbr.rel (%p124) target = $region20
        $region19: #{tpu_custom_call.1} parent=11 // pred_region
          _
        $region20: #{tpu_custom_call.1} parent=11 // pred_fallthru
          _
      $region12: #{tpu_custom_call.1} parent=5 // pred_fallthru
        _
      %p127 = scmp.lt.s32.totalorder %s12, 2
      // Predicated region
      $region21: #{tpu_custom_call.1} parent=5 // pred_check
        %p128 = pneg %p127
      $region22: #{tpu_custom_call.1} parent=5 // pred_check_branch
        %130 = sbr.rel (%p128) target = $region24
      $region23: #{tpu_custom_call.1} parent=5 // pred_region
        // Predicated region
        $region25: #{tpu_custom_call.1} parent=23 // pred_check
          %p131 = pneg %p32
        $region26: #{tpu_custom_call.1} parent=23 // pred_check_branch
          %133 = sbr.rel (%p131) target = $region28
        $region27: #{tpu_custom_call.1} parent=23 // pred_region
          %s134 = smul.u32 19, %s12
          %p135 = scmp.lt.s32.totalorder %s134, 37
          %s136 = scalar_select %p135, %s134, 37
          %s137 = smul.addr %s136, 8
          %s138 = scalar_lea.vmem %s0, %s137
          %s139 = smul.u32 19, %s12
        $region28: #{tpu_custom_call.1} parent=23 // pred_fallthru
          _
      $region24: #{tpu_custom_call.1} parent=5 // pred_fallthru
        _
      %p140 = scmp.le.s32.totalorder 1, %s12
      %p141 = scmp.lt.s32.totalorder %s12, 3
      %p142 = pnand %p140, %p141
      %p143 = pneg %p142
      // Predicated region
      $region29: #{tpu_custom_call.1} parent=5 // pred_check
        _
      $region30: #{tpu_custom_call.1} parent=5 // pred_check_branch
        %145 = sbr.rel (%p142) target = $region32
      $region31: #{tpu_custom_call.1} parent=5 // pred_region
        %s146 = ssub.s32 %s12, 1
        %s147 = smul.u32 19, %s17
        %p148 = scmp.lt.s32.totalorder %s147, 37
        %s149 = scalar_select %p148, %s147, 37
        %s150 = smul.addr %s149, 8
        %s151 = scalar_lea.vmem %s0, %s150
        %p152 = pneg %p38
        %p153 = pneg %p35
        %p154 = pneg %p59
        %p155 = pneg %p56
        %p156 = pneg %p80
        %p157 = pneg %p77
        %p158 = pneg %p106
        %p159 = pneg %p103
        %s160 = sand.u32 %s93, 1
        %s161 = scalar_lea.sflag [#allocation3], %s160
        %s162 = sand.u32 %s93, 1
        %s163 = smul.addr %s162, 152
        %s164 = scalar_lea.vmem [#allocation2], %s163
        %s165 = smul.u32 19, %s17
        %p166 = scmp.lt.s32.totalorder %s165, 37
        %s167 = scalar_select %p166, %s165, 37
        %s168 = smul.addr %s167, 8
        %s169 = scalar_lea.vmem %s0, %s168
        %s170 = smul.u32 19, %s17
        %s171 = smul.u32 19, %s17
        %v172 = vld [vmem:[%s169] sm:$0xff]
        %v173 = vld [vmem:[%s169 + $0x8] sm:$0xff]
        %v174 = vld [vmem:[%s169 + $0x10] sm:$0xff]
        %v175 = vld [vmem:[%s169 + $0x18] sm:$0xff]
        %v176 = vld [vmem:[%s169 + $0x20] sm:$0xff]
        %v177 = vld [vmem:[%s169 + $0x28] sm:$0xff]
        %v178 = vld [vmem:[%s169 + $0x30] sm:$0xff]
        %v179 = vld [vmem:[%s169 + $0x38] sm:$0xff]
        %v180 = vld [vmem:[%s169 + $0x40] sm:$0xff]
        %v181 = vld [vmem:[%s169 + $0x48] sm:$0xff]
        %v182 = vld [vmem:[%s169 + $0x50] sm:$0xff]
        %v183 = vld [vmem:[%s169 + $0x58] sm:$0xff]
        %v184 = vld [vmem:[%s169 + $0x60] sm:$0xff]
        %v185 = vld [vmem:[%s169 + $0x68] sm:$0xff]
        %v186 = vld [vmem:[%s169 + $0x70] sm:$0xff]
        %v187 = vld [vmem:[%s169 + $0x78] sm:$0xff]
        %v188 = vld [vmem:[%s169 + $0x80] sm:$0xff]
        %v189 = vld [vmem:[%s169 + $0x88] sm:$0xff]
        %v190 = vld [vmem:[%s169 + $0x90] sm:$0xff]
        %v191 = vld [vmem:[%s1] sm:$0xff]
        %v192 = vld [vmem:[%s1 + $0x8] sm:$0xff]
        %v193 = vld [vmem:[%s1 + $0x10] sm:$0xff]
        %v194 = vld [vmem:[%s1 + $0x18] sm:$0xff]
        %v195 = vld [vmem:[%s1 + $0x20] sm:$0xff]
        %v196 = vld [vmem:[%s1 + $0x28] sm:$0xff]
        %v197 = vld [vmem:[%s1 + $0x30] sm:$0xff]
        %v198 = vld [vmem:[%s1 + $0x38] sm:$0xff]
        %v199 = vld [vmem:[%s1 + $0x40] sm:$0xff]
        %v200 = vld [vmem:[%s1 + $0x48] sm:$0xff]
        %v201 = vld [vmem:[%s1 + $0x50] sm:$0xff]
        %v202 = vld [vmem:[%s1 + $0x58] sm:$0xff]
        %v203 = vld [vmem:[%s1 + $0x60] sm:$0xff]
        %v204 = vld [vmem:[%s1 + $0x68] sm:$0xff]
        %v205 = vld [vmem:[%s1 + $0x70] sm:$0xff]
        %v206 = vld [vmem:[%s1 + $0x78] sm:$0xff]
        %v207 = vld [vmem:[%s2] sm:$0x3]
        %v209 = vlaneseq
        %v210 = vshrl.u32 %v209, 7
        %v211 = vsub.s32 0, %v210
        %v212 = vrot.slane %v207, %v211
        %v213 = vlaneseq
        %v214 = vshrl.u32 %v213, 7
        %v215 = vsub.s32 1, %v214
        %v216 = vrot.slane %v207, %v215
        %vm219 = vcmask 523264
        %v221 = vsel %vm219, %v172, 0
        %v224 = vsel %vm219, %v173, 0
        %v227 = vsel %vm219, %v174, 0
        %v230 = vsel %vm219, %v175, 0
        %v233 = vsel %vm219, %v176, 0
        %v236 = vsel %vm219, %v177, 0
        %v239 = vsel %vm219, %v178, 0
        %v242 = vsel %vm219, %v179, 0
        %v245 = vsel %vm219, %v180, 0
        %v248 = vsel %vm219, %v181, 0
        %v251 = vsel %vm219, %v182, 0
        %v254 = vsel %vm219, %v183, 0
        %v257 = vsel %vm219, %v184, 0
        %v260 = vsel %vm219, %v185, 0
        %v263 = vsel %vm219, %v186, 0
        %v266 = vsel %vm219, %v187, 0
        %v269 = vsel %vm219, %v188, 0
        %v272 = vsel %vm219, %v189, 0
        %v275 = vsel %vm219, %v190, 0
        %277 = vmatprep.subr.mxu0 0.0
        %278 = vmatpush1.msra.mxu0 0.0
        %279 = vmatprep.subr.mxu0 0.0
        %280 = vmatpush1.msra.mxu0 0.0
        %281 = vmatprep.subr.mxu0 0.0
        %282 = vmatpush1.msra.mxu0 0.0
        %283 = vmatprep.subr.mxu0 0.0
        %284 = vmatpush1.msra.mxu0 0.0
        %285 = vmatprep.subr.mxu0 0.0
        %286 = vmatpush1.msra.mxu0 0.0
        %287 = vmatprep.subr.mxu0 0.0
        %288 = vmatpush1.msra.mxu0 0.0
        %289 = vmatprep.subr.mxu0 0.0
        %290 = vmatpush1.msra.mxu0 0.0
        %291 = vmatprep.subr.mxu0 0.0
        %292 = vmatpush1.msra.mxu0 0.0
        %293 = vmatprep.subr.mxu0 %v206
        %294 = vmatpush1.msra.mxu0 %v205
        %295 = vmatprep.subr.mxu0 %v204
        %296 = vmatpush1.msra.mxu0 %v203
        %297 = vmatprep.subr.mxu0 %v202
        %298 = vmatpush1.msra.mxu0 %v201
        %299 = vmatprep.subr.mxu0 %v200
        %300 = vmatpush1.msra.mxu0 %v199
        %301 = vmatprep.subr.mxu0 %v198
        %302 = vmatpush1.msra.mxu0 %v197
        %303 = vmatprep.subr.mxu0 %v196
        %304 = vmatpush1.msra.mxu0 %v195
        %305 = vmatprep.subr.mxu0 %v194
        %306 = vmatpush1.msra.mxu0 %v193
        %307 = vmatprep.subr.mxu0 %v192
        %308 = vmatpush1.msra.mxu0 %v191
        %309 = vmatprep.subr.mxu0 0.0
        %310 = vmatpush2.msra.mxu0 0.0
        %311 = vmatprep.subr.mxu0 0.0
        %312 = vmatpush2.msra.mxu0 0.0
        %313 = vmatprep.subr.mxu0 0.0
        %314 = vmatpush2.msra.mxu0 0.0
        %315 = vmatprep.subr.mxu0 0.0
        %316 = vmatpush2.msra.mxu0 0.0
        %317 = vmatprep.subr.mxu0 0.0
        %318 = vmatpush2.msra.mxu0 0.0
        %319 = vmatprep.subr.mxu0 0.0
        %320 = vmatpush2.msra.mxu0 0.0
        %321 = vmatprep.subr.mxu0 0.0
        %322 = vmatpush2.msra.mxu0 0.0
        %323 = vmatprep.subr.mxu0 0.0
        %324 = vmatpush2.msra.mxu0 0.0
        %325 = vmatprep.subr.mxu0 0.0
        %326 = vmatpush2.msra.mxu0 0.0
        %327 = vmatprep.subr.mxu0 0.0
        %328 = vmatpush2.msra.mxu0 0.0
        %329 = vmatprep.subr.mxu0 0.0
        %330 = vmatpush2.msra.mxu0 0.0
        %331 = vmatprep.subr.mxu0 0.0
        %332 = vmatpush2.msra.mxu0 0.0
        %333 = vmatprep.subr.mxu0 0.0
        %334 = vmatpush2.msra.mxu0 0.0
        %335 = vmatprep.subr.mxu0 0.0
        %336 = vmatpush2.msra.mxu0 0.0
        %337 = vmatprep.subr.mxu0 0.0
        %338 = vmatpush2.msra.mxu0 0.0
        %339 = vmatprep.subr.mxu0 0.0
        %340 = vmatpush2.msra.mxu0 0.0
        %341 = vmatprep.mubr.f32.mxu0 0.0
        %342 = vmatmul.mubr.f32.gmra.mxu0 %v221
        %v343 = vpop.f32.mrf.mxu0
        %v344 = vadd.f32 %v212, %v343
        %v345 = vpop.f32.mrf.mxu0
        %v346 = vadd.f32 %v216, %v345
        %347 = vmatprep.mubr.f32.mxu0 0.0
        %348 = vmatmul.mubr.f32.gmra.mxu0 %v224
        %v349 = vpop.f32.mrf.mxu0
        %v350 = vadd.f32 %v212, %v349
        %v351 = vpop.f32.mrf.mxu0
        %v352 = vadd.f32 %v216, %v351
        %353 = vmatprep.mubr.f32.mxu0 0.0
        %354 = vmatmul.mubr.f32.gmra.mxu0 %v227
        %v355 = vpop.f32.mrf.mxu0
        %v356 = vadd.f32 %v212, %v355
        %v357 = vpop.f32.mrf.mxu0
        %v358 = vadd.f32 %v216, %v357
        %359 = vmatprep.mubr.f32.mxu0 0.0
        %360 = vmatmul.mubr.f32.gmra.mxu0 %v230
        %v361 = vpop.f32.mrf.mxu0
        %v362 = vadd.f32 %v212, %v361
        %v363 = vpop.f32.mrf.mxu0
        %v364 = vadd.f32 %v216, %v363
        %365 = vmatprep.mubr.f32.mxu0 0.0
        %366 = vmatmul.mubr.f32.gmra.mxu0 %v233
        %v367 = vpop.f32.mrf.mxu0
        %v368 = vadd.f32 %v212, %v367
        %v369 = vpop.f32.mrf.mxu0
        %v370 = vadd.f32 %v216, %v369
        %371 = vmatprep.mubr.f32.mxu0 0.0
        %372 = vmatmul.mubr.f32.gmra.mxu0 %v236
        %v373 = vpop.f32.mrf.mxu0
        %v374 = vadd.f32 %v212, %v373
        %v375 = vpop.f32.mrf.mxu0
        %v376 = vadd.f32 %v216, %v375
        %377 = vmatprep.mubr.f32.mxu0 0.0
        %378 = vmatmul.mubr.f32.gmra.mxu0 %v239
        %v379 = vpop.f32.mrf.mxu0
        %v380 = vadd.f32 %v212, %v379
        %v381 = vpop.f32.mrf.mxu0
        %v382 = vadd.f32 %v216, %v381
        %383 = vmatprep.mubr.f32.mxu0 0.0
        %384 = vmatmul.mubr.f32.gmra.mxu0 %v242
        %v385 = vpop.f32.mrf.mxu0
        %v386 = vadd.f32 %v212, %v385
        %v387 = vpop.f32.mrf.mxu0
        %v388 = vadd.f32 %v216, %v387
        %389 = vmatprep.mubr.f32.mxu0 0.0
        %390 = vmatmul.mubr.f32.gmra.mxu0 %v245
        %v391 = vpop.f32.mrf.mxu0
        %v392 = vadd.f32 %v212, %v391
        %v393 = vpop.f32.mrf.mxu0
        %v394 = vadd.f32 %v216, %v393
        %395 = vmatprep.mubr.f32.mxu0 0.0
        %396 = vmatmul.mubr.f32.gmra.mxu0 %v248
        %v397 = vpop.f32.mrf.mxu0
        %v398 = vadd.f32 %v212, %v397
        %v399 = vpop.f32.mrf.mxu0
        %v400 = vadd.f32 %v216, %v399
        %401 = vmatprep.mubr.f32.mxu0 0.0
        %402 = vmatmul.mubr.f32.gmra.mxu0 %v251
        %v403 = vpop.f32.mrf.mxu0
        %v404 = vadd.f32 %v212, %v403
        %v405 = vpop.f32.mrf.mxu0
        %v406 = vadd.f32 %v216, %v405
        %407 = vmatprep.mubr.f32.mxu0 0.0
        %408 = vmatmul.mubr.f32.gmra.mxu0 %v254
        %v409 = vpop.f32.mrf.mxu0
        %v410 = vadd.f32 %v212, %v409
        %v411 = vpop.f32.mrf.mxu0
        %v412 = vadd.f32 %v216, %v411
        %413 = vmatprep.mubr.f32.mxu0 0.0
        %414 = vmatmul.mubr.f32.gmra.mxu0 %v257
        %v415 = vpop.f32.mrf.mxu0
        %v416 = vadd.f32 %v212, %v415
        %v417 = vpop.f32.mrf.mxu0
        %v418 = vadd.f32 %v216, %v417
        %419 = vmatprep.mubr.f32.mxu0 0.0
        %420 = vmatmul.mubr.f32.gmra.mxu0 %v260
        %v421 = vpop.f32.mrf.mxu0
        %v422 = vadd.f32 %v212, %v421
        %v423 = vpop.f32.mrf.mxu0
        %v424 = vadd.f32 %v216, %v423
        %425 = vmatprep.mubr.f32.mxu0 0.0
        %426 = vmatmul.mubr.f32.gmra.mxu0 %v263
        %v427 = vpop.f32.mrf.mxu0
        %v428 = vadd.f32 %v212, %v427
        %v429 = vpop.f32.mrf.mxu0
        %v430 = vadd.f32 %v216, %v429
        %431 = vmatprep.mubr.f32.mxu0 0.0
        %432 = vmatmul.mubr.f32.gmra.mxu0 %v266
        %v433 = vpop.f32.mrf.mxu0
        %v434 = vadd.f32 %v212, %v433
        %v435 = vpop.f32.mrf.mxu0
        %v436 = vadd.f32 %v216, %v435
        %437 = vmatprep.mubr.f32.mxu0 0.0
        %438 = vmatmul.mubr.f32.gmra.mxu0 %v269
        %v439 = vpop.f32.mrf.mxu0
        %v440 = vadd.f32 %v212, %v439
        %v441 = vpop.f32.mrf.mxu0
        %v442 = vadd.f32 %v216, %v441
        %443 = vmatprep.mubr.f32.mxu0 0.0
        %444 = vmatmul.mubr.f32.gmra.mxu0 %v272
        %v445 = vpop.f32.mrf.mxu0
        %v446 = vadd.f32 %v212, %v445
        %v447 = vpop.f32.mrf.mxu0
        %v448 = vadd.f32 %v216, %v447
        %449 = vmatprep.mubr.f32.mxu0 0.0
        %450 = vmatmul.mubr.f32.gmra.mxu0 %v275
        %v451 = vpop.f32.mrf.mxu0
        %v452 = vadd.f32 %v212, %v451
        %v453 = vpop.f32.mrf.mxu0
        %v454 = vadd.f32 %v216, %v453
        %455 = vdwg.mxu0
        %v456 = vmul.f32 %v346, %v346
        %v457 = vmul.f32 %v352, %v352
        %v458 = vmul.f32 %v358, %v358
        %v459 = vmul.f32 %v364, %v364
        %v460 = vmul.f32 %v370, %v370
        %v461 = vmul.f32 %v376, %v376
        %v462 = vmul.f32 %v382, %v382
        %v463 = vmul.f32 %v388, %v388
        %v464 = vmul.f32 %v394, %v394
        %v465 = vmul.f32 %v400, %v400
        %v466 = vmul.f32 %v406, %v406
        %v467 = vmul.f32 %v412, %v412
        %v468 = vmul.f32 %v418, %v418
        %v469 = vmul.f32 %v424, %v424
        %v470 = vmul.f32 %v430, %v430
        %v471 = vmul.f32 %v436, %v436
        %v472 = vmul.f32 %v442, %v442
        %v473 = vmul.f32 %v448, %v448
        %v474 = vmul.f32 %v454, %v454
        %v475 = vmul.f32 %v346, 0.7978846
        %v476 = vmul.f32 %v352, 0.7978846
        %v477 = vmul.f32 %v358, 0.7978846
        %v478 = vmul.f32 %v364, 0.7978846
        %v479 = vmul.f32 %v370, 0.7978846
        %v480 = vmul.f32 %v376, 0.7978846
        %v481 = vmul.f32 %v382, 0.7978846
        %v482 = vmul.f32 %v388, 0.7978846
        %v483 = vmul.f32 %v394, 0.7978846
        %v484 = vmul.f32 %v400, 0.7978846
        %v485 = vmul.f32 %v406, 0.7978846
        %v486 = vmul.f32 %v412, 0.7978846
        %v487 = vmul.f32 %v418, 0.7978846
        %v488 = vmul.f32 %v424, 0.7978846
        %v489 = vmul.f32 %v430, 0.7978846
        %v490 = vmul.f32 %v436, 0.7978846
        %v491 = vmul.f32 %v442, 0.7978846
        %v492 = vmul.f32 %v448, 0.7978846
        %v493 = vmul.f32 %v454, 0.7978846
        %v494 = vmul.f32 %v456, 0.044715
        %v495 = vmul.f32 %v457, 0.044715
        %v496 = vmul.f32 %v458, 0.044715
        %v497 = vmul.f32 %v459, 0.044715
        %v498 = vmul.f32 %v460, 0.044715
        %v499 = vmul.f32 %v461, 0.044715
        %v500 = vmul.f32 %v462, 0.044715
        %v501 = vmul.f32 %v463, 0.044715
        %v502 = vmul.f32 %v464, 0.044715
        %v503 = vmul.f32 %v465, 0.044715
        %v504 = vmul.f32 %v466, 0.044715
        %v505 = vmul.f32 %v467, 0.044715
        %v506 = vmul.f32 %v468, 0.044715
        %v507 = vmul.f32 %v469, 0.044715
        %v508 = vmul.f32 %v470, 0.044715
        %v509 = vmul.f32 %v471, 0.044715
        %v510 = vmul.f32 %v472, 0.044715
        %v511 = vmul.f32 %v473, 0.044715
        %v512 = vmul.f32 %v474, 0.044715
        %v513 = vadd.f32 %v494, 1.0
        %v514 = vadd.f32 %v495, 1.0
        %v515 = vadd.f32 %v496, 1.0
        %v516 = vadd.f32 %v497, 1.0
        %v517 = vadd.f32 %v498, 1.0
        %v518 = vadd.f32 %v499, 1.0
        %v519 = vadd.f32 %v500, 1.0
        %v520 = vadd.f32 %v501, 1.0
        %v521 = vadd.f32 %v502, 1.0
        %v522 = vadd.f32 %v503, 1.0
        %v523 = vadd.f32 %v504, 1.0
        %v524 = vadd.f32 %v505, 1.0
        %v525 = vadd.f32 %v506, 1.0
        %v526 = vadd.f32 %v507, 1.0
        %v527 = vadd.f32 %v508, 1.0
        %v528 = vadd.f32 %v509, 1.0
        %v529 = vadd.f32 %v510, 1.0
        %v530 = vadd.f32 %v511, 1.0
        %v531 = vadd.f32 %v512, 1.0
        %v532 = vmul.f32 %v475, %v513
        %v533 = vmul.f32 %v476, %v514
        %v534 = vmul.f32 %v477, %v515
        %v535 = vmul.f32 %v478, %v516
        %v536 = vmul.f32 %v479, %v517
        %v537 = vmul.f32 %v480, %v518
        %v538 = vmul.f32 %v481, %v519
        %v539 = vmul.f32 %v482, %v520
        %v540 = vmul.f32 %v483, %v521
        %v541 = vmul.f32 %v484, %v522
        %v542 = vmul.f32 %v485, %v523
        %v543 = vmul.f32 %v486, %v524
        %v544 = vmul.f32 %v487, %v525
        %v545 = vmul.f32 %v488, %v526
        %v546 = vmul.f32 %v489, %v527
        %v547 = vmul.f32 %v490, %v528
        %v548 = vmul.f32 %v491, %v529
        %v549 = vmul.f32 %v492, %v530
        %v550 = vmul.f32 %v493, %v531
        %v551 = vmul.f32 %v344, 0.5
        %v552 = vmul.f32 %v350, 0.5
        %v553 = vmul.f32 %v356, 0.5
        %v554 = vmul.f32 %v362, 0.5
        %v555 = vmul.f32 %v368, 0.5
        %v556 = vmul.f32 %v374, 0.5
        %v557 = vmul.f32 %v380, 0.5
        %v558 = vmul.f32 %v386, 0.5
        %v559 = vmul.f32 %v392, 0.5
        %v560 = vmul.f32 %v398, 0.5
        %v561 = vmul.f32 %v404, 0.5
        %v562 = vmul.f32 %v410, 0.5
        %v563 = vmul.f32 %v416, 0.5
        %v564 = vmul.f32 %v422, 0.5
        %v565 = vmul.f32 %v428, 0.5
        %v566 = vmul.f32 %v434, 0.5
        %v567 = vmul.f32 %v440, 0.5
        %v568 = vmul.f32 %v446, 0.5
        %v569 = vmul.f32 %v452, 0.5
        %v570 = vtanh.pop %v532
        %v571 = vtanh.pop %v533
        %v572 = vtanh.pop %v534
        %v573 = vtanh.pop %v535
        %v574 = vtanh.pop %v536
        %v575 = vtanh.pop %v537
        %v576 = vtanh.pop %v538
        %v577 = vtanh.pop %v539
        %v578 = vtanh.pop %v540
        %v579 = vtanh.pop %v541
        %v580 = vtanh.pop %v542
        %v581 = vtanh.pop %v543
        %v582 = vtanh.pop %v544
        %v583 = vtanh.pop %v545
        %v584 = vtanh.pop %v546
        %v585 = vtanh.pop %v547
        %v586 = vtanh.pop %v548
        %v587 = vtanh.pop %v549
        %v588 = vtanh.pop %v550
        %v589 = vadd.f32 %v570, 1.0
        %v590 = vadd.f32 %v571, 1.0
        %v591 = vadd.f32 %v572, 1.0
        %v592 = vadd.f32 %v573, 1.0
        %v593 = vadd.f32 %v574, 1.0
        %v594 = vadd.f32 %v575, 1.0
        %v595 = vadd.f32 %v576, 1.0
        %v596 = vadd.f32 %v577, 1.0
        %v597 = vadd.f32 %v578, 1.0
        %v598 = vadd.f32 %v579, 1.0
        %v599 = vadd.f32 %v580, 1.0
        %v600 = vadd.f32 %v581, 1.0
        %v601 = vadd.f32 %v582, 1.0
        %v602 = vadd.f32 %v583, 1.0
        %v603 = vadd.f32 %v584, 1.0
        %v604 = vadd.f32 %v585, 1.0
        %v605 = vadd.f32 %v586, 1.0
        %v606 = vadd.f32 %v587, 1.0
        %v607 = vadd.f32 %v588, 1.0
        %v608 = vmul.f32 %v346, %v589
        %v609 = vmul.f32 %v352, %v590
        %v610 = vmul.f32 %v358, %v591
        %v611 = vmul.f32 %v364, %v592
        %v612 = vmul.f32 %v370, %v593
        %v613 = vmul.f32 %v376, %v594
        %v614 = vmul.f32 %v382, %v595
        %v615 = vmul.f32 %v388, %v596
        %v616 = vmul.f32 %v394, %v597
        %v617 = vmul.f32 %v400, %v598
        %v618 = vmul.f32 %v406, %v599
        %v619 = vmul.f32 %v412, %v600
        %v620 = vmul.f32 %v418, %v601
        %v621 = vmul.f32 %v424, %v602
        %v622 = vmul.f32 %v430, %v603
        %v623 = vmul.f32 %v436, %v604
        %v624 = vmul.f32 %v442, %v605
        %v625 = vmul.f32 %v448, %v606
        %v626 = vmul.f32 %v454, %v607
        %v627 = vmul.f32 %v551, %v608
        %v628 = vmul.f32 %v552, %v609
        %v629 = vmul.f32 %v553, %v610
        %v630 = vmul.f32 %v554, %v611
        %v631 = vmul.f32 %v555, %v612
        %v632 = vmul.f32 %v556, %v613
        %v633 = vmul.f32 %v557, %v614
        %v634 = vmul.f32 %v558, %v615
        %v635 = vmul.f32 %v559, %v616
        %v636 = vmul.f32 %v560, %v617
        %v637 = vmul.f32 %v561, %v618
        %v638 = vmul.f32 %v562, %v619
        %v639 = vmul.f32 %v563, %v620
        %v640 = vmul.f32 %v564, %v621
        %v641 = vmul.f32 %v565, %v622
        %v642 = vmul.f32 %v566, %v623
        %v643 = vmul.f32 %v567, %v624
        %v644 = vmul.f32 %v568, %v625
        %v645 = vmul.f32 %v569, %v626
        %646 = vst [vmem:[%s164] sm:$0xff] %v627
        %647 = vst [vmem:[%s164 + $0x8] sm:$0xff] %v628
        %648 = vst [vmem:[%s164 + $0x10] sm:$0xff] %v629
        %649 = vst [vmem:[%s164 + $0x18] sm:$0xff] %v630
        %650 = vst [vmem:[%s164 + $0x20] sm:$0xff] %v631
        %651 = vst [vmem:[%s164 + $0x28] sm:$0xff] %v632
        %652 = vst [vmem:[%s164 + $0x30] sm:$0xff] %v633
        %653 = vst [vmem:[%s164 + $0x38] sm:$0xff] %v634
        %654 = vst [vmem:[%s164 + $0x40] sm:$0xff] %v635
        %655 = vst [vmem:[%s164 + $0x48] sm:$0xff] %v636
        %656 = vst [vmem:[%s164 + $0x50] sm:$0xff] %v637
        %657 = vst [vmem:[%s164 + $0x58] sm:$0xff] %v638
        %658 = vst [vmem:[%s164 + $0x60] sm:$0xff] %v639
        %659 = vst [vmem:[%s164 + $0x68] sm:$0xff] %v640
        %660 = vst [vmem:[%s164 + $0x70] sm:$0xff] %v641
        %661 = vst [vmem:[%s164 + $0x78] sm:$0xff] %v642
        %662 = vst [vmem:[%s164 + $0x80] sm:$0xff] %v643
        %663 = vst [vmem:[%s164 + $0x88] sm:$0xff] %v644
        %664 = vst [vmem:[%s164 + $0x90] sm:$0xff] %v645
        %s665 = sand.u32 %s93, 1
        %s666 = scalar_lea.sflag [#allocation3], %s665
        %s667 = sand.u32 %s93, 1
        %s668 = smul.addr %s667, 152
        %s669 = scalar_lea.vmem [#allocation2], %s668
        // Predicated region
        $region33: #{tpu_custom_call.1} parent=31 // pred_check
          %p670 = pneg %p103
        $region34: #{tpu_custom_call.1} parent=31 // pred_check_branch
          %672 = sbr.rel (%p670) target = $region36
        $region35: #{tpu_custom_call.1} parent=31 // pred_region
          %s673 = smul.u32 19, %s17
          %s675 = ssub.s32 2432, 2432
          %676 = vsyncadd %s666, %s675
          %s677 = smul.addr %s673, 128
          %s678 = scalar_lea.hbm %s3, %s677
          %s679 = sshll.u32 %s669, 4
          %s680 = int_to_ptr.vmem [resolvable:$true] %s679
          %685 = dma.vmem_to_hbm [thread:$0]  %s680, 2432, %s678, %s666, 128, 128, 8
        $region36: #{tpu_custom_call.1} parent=31 // pred_fallthru
          _
      $region32: #{tpu_custom_call.1} parent=5 // pred_fallthru
        _
      %p686 = scmp.le.s32.totalorder 2, %s12
      // Predicated region
      $region37: #{tpu_custom_call.1} parent=5 // pred_check
        %p687 = pneg %p686
      $region38: #{tpu_custom_call.1} parent=5 // pred_check_branch
        %689 = sbr.rel (%p687) target = $region40
      $region39: #{tpu_custom_call.1} parent=5 // pred_region
        %s690 = ssub.s32 %s12, 2
        // Predicated region
        $region41: #{tpu_custom_call.1} parent=39 // pred_check
          %p691 = pneg %p109
        $region42: #{tpu_custom_call.1} parent=39 // pred_check_branch
          %693 = sbr.rel (%p691) target = $region44
        $region43: #{tpu_custom_call.1} parent=39 // pred_region
          %s694 = sand.u32 %s94, 1
          %s695 = scalar_lea.sflag [#allocation3], %s694
          %s696 = sand.u32 %s94, 1
          %s697 = smul.addr %s696, 152
          %s698 = scalar_lea.vmem [#allocation2], %s697
          %699 = dma.done %s695, 2432
        $region44: #{tpu_custom_call.1} parent=39 // pred_fallthru
          _
      $region40: #{tpu_custom_call.1} parent=5 // pred_fallthru
        _
    $region6: #{tpu_custom_call.1} parent=1 // loop_footer
      %s16 = sadd.s32 1, %s12
    $region7: #{tpu_custom_call.1} parent=1 // loop_footer_branch
      %11 = sbr.rel target = $region3
    $region8: #{tpu_custom_call.1} parent=1 // loop_exit
      _
    %700 = vsyncpa [#allocation3], 1
    %s701 = scalar_lea.sflag [#allocation3], 1
    %702 = vsyncpa %s701, 1

</llo_original>
